<compile_context>
chip_gen: v7x
topology: tpu7x:2x2x1
jax: 0.10.0
libtpu: 0.0.40
codegen_flags: <defaults>
</compile_context>

<pallas_src>
import functools
import math

import jax
import jax.numpy as jnp
from jax import lax
from jax.experimental import pallas as pl
from jax.experimental.pallas import tpu as pltpu

BOND_LENGTH_TARGET = 1.5
TARGET_ANGLE = 109.5 * math.pi / 180.0  # matches torch.tensor(109.5 * torch.pi / 180.0)


def _acos(x):
    """fdlibm-style acos(x) for |x| <= 0.999 using mul/rcp/sqrt/select only.

    Mosaic has no native acos primitive; this rational approximation is accurate to
    ~1 ulp in float32 over the clamped domain.  The p/q divide uses an approximate
    EUP reciprocal (error far inside the 1e-3 test tolerance).
    """
    pi = 3.14159265358979323846
    pio2 = pi / 2.0
    pS0 = 1.66666666666666657415e-01
    pS1 = -3.25565818622400915405e-01
    pS2 = 2.01212532134862925881e-01
    pS3 = -4.00555345006794114027e-02
    pS4 = 7.91534994289814532176e-04
    pS5 = 3.47933107596021167570e-05
    qS1 = -2.40339491173441421878e+00
    qS2 = 2.02094576023350569471e+00
    qS3 = -6.88283971605453293030e-01
    qS4 = 7.70381505559019352791e-02

    ax = jnp.abs(x)
    small = ax < 0.5
    z = jnp.where(small, x * x, (1.0 - ax) * 0.5)
    p = z * (pS0 + z * (pS1 + z * (pS2 + z * (pS3 + z * (pS4 + z * pS5)))))
    q = 1.0 + z * (qS1 + z * (qS2 + z * (qS3 + z * qS4)))
    r = p * pl.reciprocal(q, approx=True)
    s = jnp.sqrt(z)
    res_small = pio2 - (x + x * r)      # |x| < 0.5
    res_pos = 2.0 * (s + s * r)         # x >= 0.5
    res_neg = pi - res_pos              # x <= -0.5
    return jnp.where(small, res_small, jnp.where(x > 0.0, res_pos, res_neg))


def _bond_vhat_kernel(n_nodes, n_edges, coords_t_ref, edges_ref, vhat_t_ref, bond_ref):
    # coords_t_ref : (8, N_pad) f32   rows 0..2 = x,y,z (rows 3..7 zero), nodes on lanes
    # edges_ref    : (2, E_pad) i32   row 0 = src, row 1 = dst; pads hold out-of-range
    #                                 sentinels (src pads unique, >= N_pad)
    # vhat_t_ref   : (8, E_pad) f32   unit bond vectors, edges lane-dense
    # bond_ref     : (1, 1)     f32   bond-length MSE
    coords_t = coords_t_ref[...]
    src_row = edges_ref[0:1, :]                                   # (1, E_pad)
    dst_row = edges_ref[1:2, :]                                   # (1, E_pad)

    N_pad = coords_t_ref.shape[1]
    E_pad = edges_ref.shape[1]

    # Fused gather, ONE MXU push: diff_t[d, e] = coords[src[e], d] - coords[dst[e], d].
    node_iota = lax.broadcasted_iota(jnp.int32, (N_pad, E_pad), 0)
    d_onehot = ((node_iota == src_row).astype(jnp.float32)
                - (node_iota == dst_row).astype(jnp.float32))      # (N_pad, E_pad)
    diff_t = lax.dot_general(coords_t, d_onehot, (((1,), (0,)), ((), ())),
                             preferred_element_type=jnp.float32)   # (8, E_pad)

    # Bond-length loss — fully edge-lane-dense; the xyz sum is a sublane (XLU) reduce.
    dist = jnp.sum(diff_t * diff_t, axis=0, keepdims=True)         # (1, E_pad)
    valid = (src_row < n_nodes).astype(jnp.float32)                # zero padded terms only
    blen = jnp.sqrt(dist + 1e-8)
    bond_sq = ((blen - BOND_LENGTH_TARGET) ** 2) * valid
    bond_ref[...] = jnp.sum(bond_sq, axis=1, keepdims=True) * (1.0 / float(n_edges))

    # Unit bond vectors (reference semantics: v / (||v|| + 1e-8)); the sign of diff
    # (sc - dc vs dc - sc) cancels in the pairwise dot products of the angle term.
    vhat_t_ref[...] = diff_t / (jnp.sqrt(dist) + 1e-8)


def _angle_kernel(vhat_i_ref, vhat_j_ref, src_col_ref, src_row_ref, sum_ref, cnt_ref):
    # vhat_i_ref : (B, 8) f32   unit bond vectors for the i (row) edge block
    # vhat_j_ref : (B, 8) f32   unit bond vectors for the j (col) edge block
    # src_col_ref: (B, 1) i32   src of the i block (pads: unique out-of-range sentinels)
    # src_row_ref: (1, B) i32   src of the j block
    # sum_ref    : (8, 128) f32 per-i-block accumulated sum of (acos - target)^2
    # cnt_ref    : (8, 128) f32 per-i-block accumulated pair count
    ib = pl.program_id(0)
    jb = pl.program_id(1)

    @pl.when(jb == 0)
    def _init():
        sum_ref[...] = jnp.zeros_like(sum_ref)
        cnt_ref[...] = jnp.zeros_like(cnt_ref)

    # Strictly-lower-triangle blocks (jb < ib) contain no valid (e_i < e_j) pairs:
    # skip the acos work entirely.
    @pl.when(jb >= ib)
    def _compute():
        bi = vhat_i_ref.shape[0]
        bj = vhat_j_ref.shape[0]

        # cos[a, b] = <vhat_i[a], vhat_j[b]>   (K = 8 contraction, A·Bᵀ form)
        cos = lax.dot_general(vhat_i_ref[...], vhat_j_ref[...],
                              (((1,), (1,)), ((), ())),
                              preferred_element_type=jnp.float32)   # (bi, bj)
        err = _acos(jnp.clip(cos, -0.999, 0.999)) - TARGET_ANGLE

        # Pair mask: global edge order e_i < e_j and same source node.  Padded edges
        # carry unique out-of-range src sentinels, so they can never match anything.
        ei = lax.broadcasted_iota(jnp.int32, (bi, bj), 0) + ib * bi
        ej = lax.broadcasted_iota(jnp.int32, (bi, bj), 1) + jb * bj
        pmask = ((ei < ej) & (src_col_ref[...] == src_row_ref[...])).astype(jnp.float32)

        sum_ref[...] += jnp.sum(pmask * (err * err), keepdims=True)   # scalar -> tile
        cnt_ref[...] += jnp.sum(pmask, keepdims=True)


def physics_loss(coords, edge_index):
    """coords: (N, 3) float32, edge_index: (2, E) int32. Returns scalar f32."""
    coords = coords.astype(jnp.float32)
    edge_index = edge_index.astype(jnp.int32)
    N, D = coords.shape
    E = edge_index.shape[1]

    # Nodes and edges padded to 128 lanes; edges further padded to a multiple of the
    # pair-block size B (<= 512 so the (B,B) angle blocks fit every generation's
    # default scoped VMEM).
    N_pad = max(128, ((N + 127) // 128) * 128)
    E_pad = max(128, ((E + 127) // 128) * 128)
    B = min(512, E_pad)
    E_pad = ((E_pad + B - 1) // B) * B
    num_b = E_pad // B

    coords_t = jnp.zeros((8, N_pad), jnp.float32).at[:D, :N].set(coords.T)

    # Pad sentinels: src pads are unique and >= N_pad (never match a real node or each
    # other); dst pads are simply out of one-hot range.
    ar = jnp.arange(E_pad, dtype=jnp.int32)
    src_full = jnp.zeros((E_pad,), jnp.int32).at[:E].set(edge_index[0])
    src_full = jnp.where(ar < E, src_full, N_pad + ar)
    dst_full = jnp.full((E_pad,), N_pad, jnp.int32).at[:E].set(edge_index[1])
    edges_row = jnp.stack([src_full, dst_full], axis=0)            # (2, E_pad)

    # --- kernel 1: fused gather + bond loss + unit bond vectors (single invocation) ---
    vhat_t, bond = pl.pallas_call(
        functools.partial(_bond_vhat_kernel, N, E),
        out_shape=(jax.ShapeDtypeStruct((8, E_pad), jnp.float32),
                   jax.ShapeDtypeStruct((1, 1), jnp.float32)),
    )(coords_t, edges_row)

    # Layout plumbing in the wrapper (XLA): present vhat edge-major for the pair matmul.
    vhat_rows = vhat_t.T                                           # (E_pad, 8)
    src_col = src_full.reshape(E_pad, 1)
    src_row = src_full.reshape(1, E_pad)

    # --- kernel 2: tiled angle term over (B, B) edge-pair blocks ---
    angle_sum, angle_cnt = pl.pallas_call(
        _angle_kernel,
        out_shape=(jax.ShapeDtypeStruct((num_b * 8, 128), jnp.float32),
                   jax.ShapeDtypeStruct((num_b * 8, 128), jnp.float32)),
        grid=(num_b, num_b),
        in_specs=[
            pl.BlockSpec((B, 8), lambda i, j: (i, 0)),    # vhat rows for i block
            pl.BlockSpec((B, 8), lambda i, j: (j, 0)),    # vhat rows for j block
            pl.BlockSpec((B, 1), lambda i, j: (i, 0)),    # src column, i block
            pl.BlockSpec((1, B), lambda i, j: (0, j)),    # src row, j block
        ],
        out_specs=[
            pl.BlockSpec((8, 128), lambda i, j: (i, 0)),  # per-i-block partial sum
            pl.BlockSpec((8, 128), lambda i, j: (i, 0)),  # per-i-block pair count
        ],
        compiler_params=pltpu.CompilerParams(
            dimension_semantics=("parallel", "arbitrary")),
    )(vhat_rows, vhat_rows, src_col, src_row)

    # Final tiny reductions in the wrapper (every element of each (8,128) tile holds
    # the same accumulated per-i-block value).
    sum_parts = angle_sum.reshape(num_b, 8, 128)[:, 0, 0]
    cnt_parts = angle_cnt.reshape(num_b, 8, 128)[:, 0, 0]
    angle_sq_sum = jnp.sum(sum_parts)
    n_pairs = jnp.sum(cnt_parts)
    angle_loss = jnp.where(n_pairs > 0.5,
                           angle_sq_sum / jnp.maximum(n_pairs, 1.0),
                           0.0)
    return bond[0, 0] + angle_loss


def physics_loss_ref(coords, edge_index):
    """Pure-JAX reference reproducing the PyTorch forward semantics."""
    src, dst = edge_index
    sc = coords[src]
    dc = coords[dst]
    dist = jnp.sum((sc - dc) ** 2, axis=1)
    bond = jnp.mean((jnp.sqrt(dist + 1e-8) - BOND_LENGTH_TARGET) ** 2)

    v = dc - sc
    vhat = v / (jnp.linalg.norm(v, axis=1, keepdims=True) + 1e-8)
    cos = jnp.clip(vhat @ vhat.T, -0.999, 0.999)
    ang = jnp.arccos(cos)
    E = src.shape[0]
    ii, jj = jnp.meshgrid(jnp.arange(E), jnp.arange(E), indexing="ij")
    mask = (ii < jj) & (src[:, None] == src[None, :])
    npairs = jnp.sum(mask)
    angle = jnp.where(
        npairs > 0,
        jnp.sum(jnp.where(mask, (ang - TARGET_ANGLE) ** 2, 0.0))
        / jnp.maximum(npairs, 1).astype(jnp.float32),
        0.0,
    )
    return bond + angle


if __name__ == "__main__":
    key = jax.random.PRNGKey(0)
    kc, ks, kd = jax.random.split(key, 3)
    N, E = 16, 24
    coords = jax.random.normal(kc, (N, 3), dtype=jnp.float32) * 1.5
    src = jax.random.randint(ks, (E,), 0, N, dtype=jnp.int32)
    dst = jax.random.randint(kd, (E,), 0, N, dtype=jnp.int32)
    edge_index = jnp.stack([src, dst])

    out = physics_loss(coords, edge_index)
    out = jax.block_until_ready(out)

    ref = physics_loss_ref(coords, edge_index)
    assert bool(jnp.isfinite(out)), out
    assert abs(float(out) - float(ref)) < 1e-3 * max(1.0, abs(float(ref))), (
        float(out), float(ref))
    print("KERNEL_OK")
</pallas_src>

<mosaic_0001>
module attributes {stable_mosaic.version = 11 : i64} {
  func.func @_bond_vhat_kernel(%arg0: memref<8x128xf32, #tpu.memory_space<vmem>>, %arg1: memref<2x128xi32, #tpu.memory_space<vmem>>, %arg2: memref<8x128xf32, #tpu.memory_space<vmem>>, %arg3: memref<1x1xf32, #tpu.memory_space<vmem>>) attributes {dimension_semantics = [], scalar_prefetch = 0 : i64, scratch_operands = 0 : i64, tpu.core_type = #tpu.core_type<tc>} {
    %c0 = arith.constant 0 : index
    %c0_0 = arith.constant 0 : index
    %0 = vector.load %arg0[%c0, %c0_0] : memref<8x128xf32, #tpu.memory_space<vmem>>, vector<8x128xf32>
    %c0_1 = arith.constant 0 : index
    %c0_2 = arith.constant 0 : index
    %1 = vector.load %arg1[%c0_1, %c0_2] : memref<2x128xi32, #tpu.memory_space<vmem>>, vector<1x128xi32>
    %c1 = arith.constant 1 : index
    %c0_3 = arith.constant 0 : index
    %2 = vector.load %arg1[%c1, %c0_3] : memref<2x128xi32, #tpu.memory_space<vmem>>, vector<1x128xi32>
    %3 = tpu.iota {dimensions = array<i32: 0>} : vector<128x128xi32>
    %4 = vector.broadcast %1 : vector<1x128xi32> to vector<128x128xi32>
    %5 = arith.cmpi eq, %3, %4 : vector<128x128xi32>
    %6 = arith.extui %5 : vector<128x128xi1> to vector<128x128xi32>
    %7 = arith.sitofp %6 : vector<128x128xi32> to vector<128x128xf32>
    %8 = vector.broadcast %2 : vector<1x128xi32> to vector<128x128xi32>
    %9 = arith.cmpi eq, %3, %8 : vector<128x128xi32>
    %10 = arith.extui %9 : vector<128x128xi1> to vector<128x128xi32>
    %11 = arith.sitofp %10 : vector<128x128xi32> to vector<128x128xf32>
    %12 = arith.subf %7, %11 : vector<128x128xf32>
    %cst = arith.constant dense<0.000000e+00> : vector<8x128xf32>
    %13 = tpu.matmul %0, %12, %cst {dimension_numbers = #tpu.dot_dimension_numbers<[1], [0], [0], [1], [0, 0, 1, 1], [], []>} : vector<8x128xf32>, vector<128x128xf32>, vector<8x128xf32> -> vector<8x128xf32>
    %14 = arith.mulf %13, %13 : vector<8x128xf32>
    %cst_4 = arith.constant dense<0.000000e+00> : vector<128xf32>
    %15 = vector.multi_reduction <add>, %14, %cst_4 [0] : vector<8x128xf32> to vector<128xf32>
    %16 = vector.shape_cast %15 : vector<128xf32> to vector<1x128xf32>
    %c16_i32 = arith.constant 16 : i32
    %17 = vector.broadcast %c16_i32 : i32 to vector<1x128xi32>
    %18 = arith.cmpi slt, %1, %17 : vector<1x128xi32>
    %19 = arith.extui %18 : vector<1x128xi1> to vector<1x128xi32>
    %20 = arith.sitofp %19 : vector<1x128xi32> to vector<1x128xf32>
    %cst_5 = arith.constant 9.99999993E-9 : f32
    %21 = vector.broadcast %cst_5 : f32 to vector<1x128xf32>
    %22 = arith.addf %16, %21 : vector<1x128xf32>
    %23 = math.sqrt %22 : vector<1x128xf32>
    %cst_6 = arith.constant 1.500000e+00 : f32
    %24 = vector.broadcast %cst_6 : f32 to vector<1x128xf32>
    %25 = arith.subf %23, %24 : vector<1x128xf32>
    %26 = arith.mulf %25, %25 : vector<1x128xf32>
    %27 = arith.mulf %26, %20 : vector<1x128xf32>
    %cst_7 = arith.constant dense<0.000000e+00> : vector<1xf32>
    %28 = vector.multi_reduction <add>, %27, %cst_7 [1] : vector<1x128xf32> to vector<1xf32>
    %29 = vector.shape_cast %28 : vector<1xf32> to vector<1x1xf32>
    %cst_8 = arith.constant 0.0416666679 : f32
    %30 = vector.broadcast %cst_8 : f32 to vector<1x1xf32>
    %31 = arith.mulf %29, %30 : vector<1x1xf32>
    %c0_9 = arith.constant 0 : index
    %c0_10 = arith.constant 0 : index
    %32 = vector.load %arg3[%c0_9, %c0_10] : memref<1x1xf32, #tpu.memory_space<vmem>>, vector<1x1xf32>
    tpu.vector_store %arg3[%c0_9, %c0_10], %31 {strides = array<i32>} : memref<1x1xf32, #tpu.memory_space<vmem>>, vector<1x1xf32>,
    %33 = math.sqrt %16 : vector<1x128xf32>
    %cst_11 = arith.constant 9.99999993E-9 : f32
    %34 = vector.broadcast %cst_11 : f32 to vector<1x128xf32>
    %35 = arith.addf %33, %34 : vector<1x128xf32>
    %36 = vector.broadcast %35 : vector<1x128xf32> to vector<8x128xf32>
    %37 = arith.divf %13, %36 : vector<8x128xf32>
    %c0_12 = arith.constant 0 : index
    %c0_13 = arith.constant 0 : index
    %38 = vector.load %arg2[%c0_12, %c0_13] : memref<8x128xf32, #tpu.memory_space<vmem>>, vector<8x128xf32>
    tpu.vector_store %arg2[%c0_12, %c0_13], %37 {strides = array<i32>} : memref<8x128xf32, #tpu.memory_space<vmem>>, vector<8x128xf32>,
    return
  }
}

</mosaic_0001>

<llo_original>
// kernel: tpu_custom_call.1
$region0: #{tpu_custom_call.1}
  #allocation0 [shape = 'u32[]', space=smem, size = 0x4, offset = 0x4, fixed_abs, tag = 'smem constant byte address 0x4 - core index']
  #allocation1 [shape = 'u32[144,128]{1,0:T(1,128)}', space=vmem, size = 0x12000, scoped, tag = 'internal scratch']
  %s0 = inlined_call_operand.hbm [shape: f32[8,128], index: 0, kind: input, shape index: {}]
  %s1 = inlined_call_operand.vmem [shape: s32[2,128], index: 1, kind: input, shape index: {}]
  %s2 = inlined_call_operand.hbm [shape: f32[8,128], index: 2, kind: output, shape index: {0}]
  %s3 = inlined_call_operand.hbm [shape: f32[1,1], index: 3, kind: output, shape index: {1}]
  %4 = xla_tuple %s2, %s3
  %s5 = sld [smem:[#allocation0]]
  $region30: #{tpu_custom_call.1} parent=0
    _
  %s7 = ssub.s32 1, %s5
  %s8 = scalar_select 0, %s7, %s5
  $region1: #{tpu_custom_call.1} parent=0
    #allocation2 [shape = 'u8[4096]{0}', space=vmem, size = 0x1000, scoped, tag = 'input window, operand 0, single buffered']
    #allocation3 [shape = 's32[1]{0}', space=sflag, size = 0x4, scoped, tag = 'scoped memory for tpu_custom_call.1']
    #allocation4 [shape = 's32[1]{0}', space=sflag, size = 0x4, scoped, tag = 'scoped memory for tpu_custom_call.1']
    #allocation5 [shape = 'u8[4096]{0}', space=vmem, size = 0x1000, scoped, tag = 'output window, operand 0, single buffered']
    #allocation6 [shape = 'u8[512]{0}', space=vmem, size = 0x400, scoped, tag = 'output window, operand 1, single buffered']
    #allocation7 [shape = 's32[1]{0}', space=sflag, size = 0x4, scoped, tag = 'scoped memory for tpu_custom_call.1']
    %9 = vsyncpa [#allocation3], 0
    %10 = vsyncpa [#allocation4], 0
    %11 = vsyncpa [#allocation7], 0
    // Predicated region
    $region2: #{tpu_custom_call.1} parent=1 // pred_check
      _
    $region3: #{tpu_custom_call.1} parent=1 // pred_check_branch
      %13 = sbr.rel (0) target = $region5
    $region4: #{tpu_custom_call.1} parent=1 // pred_region
      %s15 = ssub.s32 128, 128
      %16 = vsyncadd [#allocation3], %s15
      %s18 = sshll.u32 [#allocation2], 4
      %s19 = int_to_ptr.vmem [resolvable:$true] %s18
      %21 = dma.hbm_to_vmem [thread:$0]  %s0, 128, %s19, [#allocation3]
    $region5: #{tpu_custom_call.1} parent=1 // pred_fallthru
      _
    // Predicated region
    $region6: #{tpu_custom_call.1} parent=1 // pred_check
      _
    $region7: #{tpu_custom_call.1} parent=1 // pred_check_branch
      %23 = sbr.rel (0) target = $region9
    $region8: #{tpu_custom_call.1} parent=1 // pred_region
      _
    $region9: #{tpu_custom_call.1} parent=1 // pred_fallthru
      _
    // Predicated region
    $region10: #{tpu_custom_call.1} parent=1 // pred_check
      _
    $region11: #{tpu_custom_call.1} parent=1 // pred_check_branch
      %25 = sbr.rel (0) target = $region13
    $region12: #{tpu_custom_call.1} parent=1 // pred_region
      %26 = dma.done [#allocation3], 128
    $region13: #{tpu_custom_call.1} parent=1 // pred_fallthru
      _
    %v27 = vld [vmem:[#allocation2] sm:$0xff]
    %v28 = vld [vmem:[%s1] sm:$0x1]
    %v29 = vld [vmem:[%s1 + $0x1] sm:$0x1]
    %v30 = vlaneseq
    %v31 = vshrl.u32 %v30, 7
    %v32 = vadd.s32 %v31, 8
    %v33 = vadd.s32 %v31, 16
    %v34 = vadd.s32 %v31, 24
    %v35 = vadd.s32 %v31, 32
    %v36 = vadd.s32 %v31, 40
    %v37 = vadd.s32 %v31, 48
    %v38 = vadd.s32 %v31, 56
    %v39 = vadd.s32 %v31, 64
    %v40 = vadd.s32 %v31, 72
    %v41 = vadd.s32 %v31, 80
    %v42 = vadd.s32 %v31, 88
    %v43 = vadd.s32 %v31, 96
    %v44 = vadd.s32 %v31, 104
    %v45 = vadd.s32 %v31, 112
    %v46 = vadd.s32 %v31, 120
    %v47 = vlaneseq
    %v48 = vshrl.u32 %v47, 7
    %v49 = vsub.s32 0, %v48
    %v50 = vrot.slane %v28, %v49
    %vm51 = vcmp.eq.s32.totalorder %v31, %v50
    %vm52 = vcmp.eq.s32.totalorder %v32, %v50
    %vm53 = vcmp.eq.s32.totalorder %v33, %v50
    %vm54 = vcmp.eq.s32.totalorder %v34, %v50
    %vm55 = vcmp.eq.s32.totalorder %v35, %v50
    %vm56 = vcmp.eq.s32.totalorder %v36, %v50
    %vm57 = vcmp.eq.s32.totalorder %v37, %v50
    %vm58 = vcmp.eq.s32.totalorder %v38, %v50
    %vm59 = vcmp.eq.s32.totalorder %v39, %v50
    %vm60 = vcmp.eq.s32.totalorder %v40, %v50
    %vm61 = vcmp.eq.s32.totalorder %v41, %v50
    %vm62 = vcmp.eq.s32.totalorder %v42, %v50
    %vm63 = vcmp.eq.s32.totalorder %v43, %v50
    %vm64 = vcmp.eq.s32.totalorder %v44, %v50
    %vm65 = vcmp.eq.s32.totalorder %v45, %v50
    %vm66 = vcmp.eq.s32.totalorder %v46, %v50
    %v67 = vsel %vm51, 1, 0
    %v68 = vsel %vm52, 1, 0
    %v69 = vsel %vm53, 1, 0
    %v70 = vsel %vm54, 1, 0
    %v71 = vsel %vm55, 1, 0
    %v72 = vsel %vm56, 1, 0
    %v73 = vsel %vm57, 1, 0
    %v74 = vsel %vm58, 1, 0
    %v75 = vsel %vm59, 1, 0
    %v76 = vsel %vm60, 1, 0
    %v77 = vsel %vm61, 1, 0
    %v78 = vsel %vm62, 1, 0
    %v79 = vsel %vm63, 1, 0
    %v80 = vsel %vm64, 1, 0
    %v81 = vsel %vm65, 1, 0
    %v82 = vsel %vm66, 1, 0
    %v83 = vcvt.s32.f32 %v67
    %v84 = vcvt.s32.f32 %v68
    %v85 = vcvt.s32.f32 %v69
    %v86 = vcvt.s32.f32 %v70
    %v87 = vcvt.s32.f32 %v71
    %v88 = vcvt.s32.f32 %v72
    %v89 = vcvt.s32.f32 %v73
    %v90 = vcvt.s32.f32 %v74
    %v91 = vcvt.s32.f32 %v75
    %v92 = vcvt.s32.f32 %v76
    %v93 = vcvt.s32.f32 %v77
    %v94 = vcvt.s32.f32 %v78
    %v95 = vcvt.s32.f32 %v79
    %v96 = vcvt.s32.f32 %v80
    %v97 = vcvt.s32.f32 %v81
    %v98 = vcvt.s32.f32 %v82
    %v99 = vlaneseq
    %v100 = vshrl.u32 %v99, 7
    %v101 = vsub.s32 0, %v100
    %v102 = vrot.slane %v29, %v101
    %vm103 = vcmp.eq.s32.totalorder %v31, %v102
    %vm104 = vcmp.eq.s32.totalorder %v32, %v102
    %vm105 = vcmp.eq.s32.totalorder %v33, %v102
    %vm106 = vcmp.eq.s32.totalorder %v34, %v102
    %vm107 = vcmp.eq.s32.totalorder %v35, %v102
    %vm108 = vcmp.eq.s32.totalorder %v36, %v102
    %vm109 = vcmp.eq.s32.totalorder %v37, %v102
    %vm110 = vcmp.eq.s32.totalorder %v38, %v102
    %vm111 = vcmp.eq.s32.totalorder %v39, %v102
    %vm112 = vcmp.eq.s32.totalorder %v40, %v102
    %vm113 = vcmp.eq.s32.totalorder %v41, %v102
    %vm114 = vcmp.eq.s32.totalorder %v42, %v102
    %vm115 = vcmp.eq.s32.totalorder %v43, %v102
    %vm116 = vcmp.eq.s32.totalorder %v44, %v102
    %vm117 = vcmp.eq.s32.totalorder %v45, %v102
    %vm118 = vcmp.eq.s32.totalorder %v46, %v102
    %v119 = vsel %vm103, 1, 0
    %v120 = vsel %vm104, 1, 0
    %v121 = vsel %vm105, 1, 0
    %v122 = vsel %vm106, 1, 0
    %v123 = vsel %vm107, 1, 0
    %v124 = vsel %vm108, 1, 0
    %v125 = vsel %vm109, 1, 0
    %v126 = vsel %vm110, 1, 0
    %v127 = vsel %vm111, 1, 0
    %v128 = vsel %vm112, 1, 0
    %v129 = vsel %vm113, 1, 0
    %v130 = vsel %vm114, 1, 0
    %v131 = vsel %vm115, 1, 0
    %v132 = vsel %vm116, 1, 0
    %v133 = vsel %vm117, 1, 0
    %v134 = vsel %vm118, 1, 0
    %v135 = vcvt.s32.f32 %v119
    %v136 = vcvt.s32.f32 %v120
    %v137 = vcvt.s32.f32 %v121
    %v138 = vcvt.s32.f32 %v122
    %v139 = vcvt.s32.f32 %v123
    %v140 = vcvt.s32.f32 %v124
    %v141 = vcvt.s32.f32 %v125
    %v142 = vcvt.s32.f32 %v126
    %v143 = vcvt.s32.f32 %v127
    %v144 = vcvt.s32.f32 %v128
    %v145 = vcvt.s32.f32 %v129
    %v146 = vcvt.s32.f32 %v130
    %v147 = vcvt.s32.f32 %v131
    %v148 = vcvt.s32.f32 %v132
    %v149 = vcvt.s32.f32 %v133
    %v150 = vcvt.s32.f32 %v134
    %v151 = vsub.f32 %v83, %v135
    %v152 = vsub.f32 %v84, %v136
    %v153 = vsub.f32 %v85, %v137
    %v154 = vsub.f32 %v86, %v138
    %v155 = vsub.f32 %v87, %v139
    %v156 = vsub.f32 %v88, %v140
    %v157 = vsub.f32 %v89, %v141
    %v158 = vsub.f32 %v90, %v142
    %v159 = vsub.f32 %v91, %v143
    %v160 = vsub.f32 %v92, %v144
    %v161 = vsub.f32 %v93, %v145
    %v162 = vsub.f32 %v94, %v146
    %v163 = vsub.f32 %v95, %v147
    %v164 = vsub.f32 %v96, %v148
    %v165 = vsub.f32 %v97, %v149
    %v166 = vsub.f32 %v98, %v150
    %167 = vmatprep.subr.mxu0 0.0
    %168 = vmatpush1.msra.mxu0 %v151
    %169 = vmatprep.subr.mxu0 0.0
    %170 = vmatpush1.msra.mxu0 %v152
    %171 = vmatprep.subr.mxu0 0.0
    %172 = vmatpush1.msra.mxu0 %v153
    %173 = vmatprep.subr.mxu0 0.0
    %174 = vmatpush1.msra.mxu0 %v154
    %175 = vmatprep.subr.mxu0 0.0
    %176 = vmatpush1.msra.mxu0 %v155
    %177 = vmatprep.subr.mxu0 0.0
    %178 = vmatpush1.msra.mxu0 %v156
    %179 = vmatprep.subr.mxu0 0.0
    %180 = vmatpush1.msra.mxu0 %v157
    %181 = vmatprep.subr.mxu0 0.0
    %182 = vmatpush1.msra.mxu0 %v158
    %183 = vmatprep.subr.mxu0 0.0
    %184 = vmatpush1.msra.mxu0 %v159
    %185 = vmatprep.subr.mxu0 0.0
    %186 = vmatpush1.msra.mxu0 %v160
    %187 = vmatprep.subr.mxu0 0.0
    %188 = vmatpush1.msra.mxu0 %v161
    %189 = vmatprep.subr.mxu0 0.0
    %190 = vmatpush1.msra.mxu0 %v162
    %191 = vmatprep.subr.mxu0 0.0
    %192 = vmatpush1.msra.mxu0 %v163
    %193 = vmatprep.subr.mxu0 0.0
    %194 = vmatpush1.msra.mxu0 %v164
    %195 = vmatprep.subr.mxu0 0.0
    %196 = vmatpush1.msra.mxu0 %v165
    %197 = vmatprep.subr.mxu0 0.0
    %198 = vmatpush1.msra.mxu0 %v166
    %199 = vmatprep.subr.mxu0 0.0
    %200 = vmatpush1.msra.mxu0 0.0
    %201 = vmatprep.subr.mxu0 0.0
    %202 = vmatpush1.msra.mxu0 0.0
    %203 = vmatprep.subr.mxu0 0.0
    %204 = vmatpush1.msra.mxu0 0.0
    %205 = vmatprep.subr.mxu0 0.0
    %206 = vmatpush1.msra.mxu0 0.0
    %207 = vmatprep.subr.mxu0 0.0
    %208 = vmatpush1.msra.mxu0 0.0
    %209 = vmatprep.subr.mxu0 0.0
    %210 = vmatpush1.msra.mxu0 0.0
    %211 = vmatprep.subr.mxu0 0.0
    %212 = vmatpush1.msra.mxu0 0.0
    %213 = vmatprep.subr.mxu0 0.0
    %214 = vmatpush1.msra.mxu0 0.0
    %215 = vmatprep.subr.mxu0 0.0
    %216 = vmatpush1.msra.mxu0 0.0
    %217 = vmatprep.subr.mxu0 0.0
    %218 = vmatpush1.msra.mxu0 0.0
    %219 = vmatprep.subr.mxu0 0.0
    %220 = vmatpush1.msra.mxu0 0.0
    %221 = vmatprep.subr.mxu0 0.0
    %222 = vmatpush1.msra.mxu0 0.0
    %223 = vmatprep.subr.mxu0 0.0
    %224 = vmatpush1.msra.mxu0 0.0
    %225 = vmatprep.subr.mxu0 0.0
    %226 = vmatpush1.msra.mxu0 0.0
    %227 = vmatprep.subr.mxu0 0.0
    %228 = vmatpush1.msra.mxu0 0.0
    %229 = vmatprep.subr.mxu0 0.0
    %230 = vmatpush1.msra.mxu0 0.0
    %231 = vmatprep.mubr.f32.mxu0 0.0
    %232 = vmatmul.mubr.f32.gmra.mrb[0].mxu0 %v27
    %v233 = vpop.f32.mrb[0].mxu0
    %v234 = vadd.f32 0.0, %v233
    %v235 = vpop.f32.mrb[0].mxu0
    %236 = vdwg.mxu0
    %v237 = vmul.f32 %v234, %v234
    %v238 = vrot.slane %v237, 4
    %v239 = vadd.f32 %v237, %v238
    %v240 = vrot.slane %v239, 2
    %v241 = vadd.f32 %v239, %v240
    %v242 = vrot.slane %v241, 1
    %v243 = vadd.f32 %v241, %v242
    %vm244 = vcmp.lt.s32.totalorder %v28, 16
    %v245 = vsel %vm244, 1, 0
    %v246 = vcvt.s32.f32 %v245
    %v247 = vadd.f32 %v243, 1e-08
    %v248 = vrsqrt.pop %v247
    %v249 = vmul.f32 %v247, %v248
    %vm250 = vcmp.eq.f32.partialorder %v247, inf
    %v251 = vsel %vm250, %v247, %v249
    %vm252 = vcmp.eq.f32.partialorder %v247, 0.0
    %v253 = vand.u32 %v247, 2147483648
    %v254 = vsel %vm252, %v253, %v251
    %v255 = vsub.f32 %v254, 1.5
    %v256 = vmul.f32 %v255, %v255
    %v257 = vmul.f32 %v256, %v246
    %vm258 = vcmask 1040384
    %v259 = vsel %vm258, %v257, 0.0
    %260 = vadd.xlane.f32.xlu0 %v259
    %v261 = vpop.xlane.xlu0 %260
    %v262 = vmul.f32 %v261, 0.041666668
    %vm263 = vcmask 0
    %264 = vst.msk [vmem:[#allocation6] sm:$0x1] %vm263, %v262
    %v265 = vrsqrt.pop %v243
    %v266 = vmul.f32 %v243, %v265
    %vm267 = vcmp.eq.f32.partialorder %v243, inf
    %v268 = vsel %vm267, %v243, %v266
    %vm269 = vcmp.eq.f32.partialorder %v243, 0.0
    %v270 = vand.u32 %v243, 2147483648
    %v271 = vsel %vm269, %v270, %v268
    %v272 = vadd.f32 %v271, 1e-08
    %v273 = vrcp.pop %v272
    %v274 = vmul.f32 %v234, %v273
    %275 = vst [vmem:[#allocation5] sm:$0xff] %v274
    // Predicated region
    $region14: #{tpu_custom_call.1} parent=1 // pred_check
      _
    $region15: #{tpu_custom_call.1} parent=1 // pred_check_branch
      %277 = sbr.rel (0) target = $region17
    $region16: #{tpu_custom_call.1} parent=1 // pred_region
      %s279 = ssub.s32 128, 128
      %280 = vsyncadd [#allocation4], %s279
      %s282 = sshll.u32 [#allocation5], 4
      %s283 = int_to_ptr.vmem [resolvable:$true] %s282
      %285 = dma.vmem_to_hbm [thread:$0]  %s283, 128, %s2, [#allocation4]
    $region17: #{tpu_custom_call.1} parent=1 // pred_fallthru
      _
    // Predicated region
    $region18: #{tpu_custom_call.1} parent=1 // pred_check
      _
    $region19: #{tpu_custom_call.1} parent=1 // pred_check_branch
      %287 = sbr.rel (0) target = $region21
    $region20: #{tpu_custom_call.1} parent=1 // pred_region
      %s289 = ssub.s32 16, 16
      %290 = vsyncadd [#allocation7], %s289
      %s292 = sshll.u32 [#allocation6], 4
      %s293 = int_to_ptr.vmem [resolvable:$true] %s292
      %295 = dma.vmem_to_hbm [thread:$0]  %s293, 16, %s3, [#allocation7]
    $region21: #{tpu_custom_call.1} parent=1 // pred_fallthru
      _
    // Predicated region
    $region22: #{tpu_custom_call.1} parent=1 // pred_check
      _
    $region23: #{tpu_custom_call.1} parent=1 // pred_check_branch
      %297 = sbr.rel (0) target = $region25
    $region24: #{tpu_custom_call.1} parent=1 // pred_region
      %298 = dma.done [#allocation4], 128
    $region25: #{tpu_custom_call.1} parent=1 // pred_fallthru
      _
    // Predicated region
    $region26: #{tpu_custom_call.1} parent=1 // pred_check
      _
    $region27: #{tpu_custom_call.1} parent=1 // pred_check_branch
      %300 = sbr.rel (0) target = $region29
    $region28: #{tpu_custom_call.1} parent=1 // pred_region
      %301 = dma.done [#allocation7], 16
    $region29: #{tpu_custom_call.1} parent=1 // pred_fallthru
      _
    %302 = vsyncpa [#allocation3], 1
    %303 = vsyncpa [#allocation4], 1
    %304 = vsyncpa [#allocation7], 1

</llo_original>
